<compile_context>
chip_gen: v6e
topology: v6e:2x2x1
jax: 0.10.0
libtpu: 0.0.40
codegen_flags: <defaults>
</compile_context>

<pallas_src>
import math

import jax
import jax.numpy as jnp
from jax.experimental import pallas as pl
from jax.experimental.pallas import tpu as pltpu


def _linear_encoding_kernel(pe_ref, w1_ref, b1_ref, w2_ref, b2_ref, x_ref, o_ref):
    """out = x + (SiLU(pe @ W1 + b1) @ W2 + b2), for the whole batch at once.

    pe_ref : (S, E)    sinusoidal PE slice
    w1_ref : (E, H)    first projection weight, stored (in, out)
    b1_ref : (1, H)    first projection bias
    w2_ref : (H, E)    second projection weight, stored (in, out)
    b2_ref : (1, E)    second projection bias
    x_ref  : (B, S, E) full input
    o_ref  : (B, S, E) full output
    """
    # Batch-invariant projection — computed exactly once (single grid step).
    pe = pe_ref[...].astype(jnp.float32)                                       # (S, E)
    h = jnp.dot(pe, w1_ref[...].astype(jnp.float32),
                preferred_element_type=jnp.float32)
    h = h + b1_ref[...].astype(jnp.float32)                                    # (S, H)
    h = h * jax.nn.sigmoid(h)                                                  # SiLU (EUP)
    proj = jnp.dot(h, w2_ref[...].astype(jnp.float32),
                   preferred_element_type=jnp.float32)
    proj = proj + b2_ref[...].astype(jnp.float32)                              # (S, E)

    # Residual add in f32, then one cast to the output dtype.
    x = x_ref[...].astype(jnp.float32)                                         # (B, S, E)
    o_ref[...] = (x + proj[None, :, :]).astype(o_ref.dtype)


def linear_encoding_forward(x, pe, w1, b1, w2, b2):
    """x: (B, S, E). pe: (max_seq_len, E). Returns (B, S, E)."""
    B, S, E = x.shape
    H = w1.shape[1]
    pe_slice = pe[:S, :]                    # == pe[:, :seq_len, :] with leading 1 squeezed
    b1_2d = b1.reshape(1, H)
    b2_2d = b2.reshape(1, E)

    return pl.pallas_call(
        _linear_encoding_kernel,
        out_shape=jax.ShapeDtypeStruct((B, S, E), x.dtype),
        # Single grid point: everything fits VMEM trivially at these sizes, so
        # the projection is computed once and there is no per-step pipeline
        # overhead.  (At large B*S*E, tile rows of x over a "parallel" axis.)
        grid=(1,),
        in_specs=[
            pl.BlockSpec((S, E), lambda i: (0, 0)),          # pe slice
            pl.BlockSpec((E, H), lambda i: (0, 0)),          # W1
            pl.BlockSpec((1, H), lambda i: (0, 0)),          # b1
            pl.BlockSpec((H, E), lambda i: (0, 0)),          # W2
            pl.BlockSpec((1, E), lambda i: (0, 0)),          # b2
            pl.BlockSpec((B, S, E), lambda i: (0, 0, 0)),    # x (full batch)
        ],
        out_specs=pl.BlockSpec((B, S, E), lambda i: (0, 0, 0)),
        compiler_params=pltpu.CompilerParams(
            dimension_semantics=("arbitrary",),   # single step; nothing to shard
        ),
    )(pe_slice, w1, b1_2d, w2, b2_2d, x)


def make_sinusoidal_encoding(max_seq_len: int, embed_dim: int, dtype=jnp.float32):
    """Replicates BaseEncoding._generate_sinusoidal_encoding (leading 1-dim dropped)."""
    position = jnp.arange(max_seq_len, dtype=dtype)[:, None]                   # (S, 1)
    div_term = jnp.exp(
        jnp.arange(0, embed_dim, 2, dtype=dtype) * (-math.log(10000.0) / embed_dim)
    )                                                                          # (E/2,)
    angles = position * div_term                                               # (S, E/2)
    pe = jnp.zeros((max_seq_len, embed_dim), dtype=dtype)
    pe = pe.at[:, 0::2].set(jnp.sin(angles))
    pe = pe.at[:, 1::2].set(jnp.cos(angles))
    return pe


def init_projection_params(key, embed_dim: int, hidden_dim: int, dtype=jnp.float32):
    """nn.Linear-style init (uniform +-1/sqrt(fan_in)); weights stored (in, out)."""
    k1, k2, k3, k4 = jax.random.split(key, 4)
    bound1 = 1.0 / math.sqrt(embed_dim)
    bound2 = 1.0 / math.sqrt(hidden_dim)
    w1 = jax.random.uniform(k1, (embed_dim, hidden_dim), dtype, -bound1, bound1)
    b1 = jax.random.uniform(k2, (hidden_dim,), dtype, -bound1, bound1)
    w2 = jax.random.uniform(k3, (hidden_dim, embed_dim), dtype, -bound2, bound2)
    b2 = jax.random.uniform(k4, (embed_dim,), dtype, -bound2, bound2)
    return w1, b1, w2, b2


if __name__ == "__main__":
    # Small config consistent with the module (ConfigTransformer fields).
    batch = 2
    seq_len = 8
    embed_dim = 32
    hidden_dim = 64
    max_seq_len = 16
    dtype = jnp.float32

    key = jax.random.PRNGKey(0)
    kx, kp = jax.random.split(key)

    x = jax.random.normal(kx, (batch, seq_len, embed_dim), dtype=dtype)
    pe = make_sinusoidal_encoding(max_seq_len, embed_dim, dtype=dtype)
    w1, b1, w2, b2 = init_projection_params(kp, embed_dim, hidden_dim, dtype=dtype)

    out = linear_encoding_forward(x, pe, w1, b1, w2, b2)
    out = jax.block_until_ready(out)

    # Pure-JAX reference (eval-mode dropout = identity).
    h_ref = pe[:seq_len] @ w1 + b1
    h_ref = h_ref * jax.nn.sigmoid(h_ref)
    proj_ref = h_ref @ w2 + b2
    ref = x + proj_ref[None, :, :]
    assert jnp.allclose(out, ref, atol=1e-5, rtol=1e-5), "mismatch vs reference"

    print("KERNEL_OK")
</pallas_src>

<mosaic_0001>
module attributes {stable_mosaic.version = 11 : i64} {
  func.func @_linear_encoding_kernel(%arg0: i32, %arg1: memref<8x32xf32, #tpu.memory_space<vmem>>, %arg2: memref<32x64xf32, #tpu.memory_space<vmem>>, %arg3: memref<1x64xf32, #tpu.memory_space<vmem>>, %arg4: memref<64x32xf32, #tpu.memory_space<vmem>>, %arg5: memref<1x32xf32, #tpu.memory_space<vmem>>, %arg6: memref<2x8x32xf32, #tpu.memory_space<vmem>>, %arg7: memref<2x8x32xf32, #tpu.memory_space<vmem>>) attributes {dimension_semantics = [#tpu.dimension_semantics<arbitrary>], iteration_bounds = array<i64: 1>, scalar_prefetch = 0 : i64, scratch_operands = 0 : i64, tpu.core_type = #tpu.core_type<tc>, window_params = [{pipeline_mode = #tpu.pipeline_mode<synchronous>, transform_indices = @transform_0, window_bounds = array<i64: 8, 32>}, {pipeline_mode = #tpu.pipeline_mode<synchronous>, transform_indices = @transform_1, window_bounds = array<i64: 32, 64>}, {pipeline_mode = #tpu.pipeline_mode<synchronous>, transform_indices = @transform_2, window_bounds = array<i64: 1, 64>}, {pipeline_mode = #tpu.pipeline_mode<synchronous>, transform_indices = @transform_3, window_bounds = array<i64: 64, 32>}, {pipeline_mode = #tpu.pipeline_mode<synchronous>, transform_indices = @transform_4, window_bounds = array<i64: 1, 32>}, {pipeline_mode = #tpu.pipeline_mode<synchronous>, transform_indices = @transform_5, window_bounds = array<i64: 2, 8, 32>}, {pipeline_mode = #tpu.pipeline_mode<synchronous>, transform_indices = @transform_6, window_bounds = array<i64: 2, 8, 32>}]} {
    %c0 = arith.constant 0 : index
    %c0_0 = arith.constant 0 : index
    %0 = vector.load %arg1[%c0, %c0_0] : memref<8x32xf32, #tpu.memory_space<vmem>>, vector<8x32xf32>
    %c0_1 = arith.constant 0 : index
    %c0_2 = arith.constant 0 : index
    %1 = vector.load %arg2[%c0_1, %c0_2] : memref<32x64xf32, #tpu.memory_space<vmem>>, vector<32x64xf32>
    %cst = arith.constant dense<0.000000e+00> : vector<8x64xf32>
    %2 = tpu.matmul %0, %1, %cst {dimension_numbers = #tpu.dot_dimension_numbers<[1], [0], [0], [1], [0, 0, 1, 1], [], []>} : vector<8x32xf32>, vector<32x64xf32>, vector<8x64xf32> -> vector<8x64xf32>
    %c0_3 = arith.constant 0 : index
    %c0_4 = arith.constant 0 : index
    %3 = vector.load %arg3[%c0_3, %c0_4] : memref<1x64xf32, #tpu.memory_space<vmem>>, vector<1x64xf32>
    %4 = vector.broadcast %3 : vector<1x64xf32> to vector<8x64xf32>
    %5 = arith.addf %2, %4 : vector<8x64xf32>
    %6 = arith.negf %5 : vector<8x64xf32>
    %7 = math.exp %6 : vector<8x64xf32>
    %cst_5 = arith.constant 1.000000e+00 : f32
    %8 = vector.broadcast %cst_5 : f32 to vector<8x64xf32>
    %9 = arith.addf %8, %7 : vector<8x64xf32>
    %10 = arith.divf %8, %9 : vector<8x64xf32>
    %11 = arith.mulf %5, %10 : vector<8x64xf32>
    %c0_6 = arith.constant 0 : index
    %c0_7 = arith.constant 0 : index
    %12 = vector.load %arg4[%c0_6, %c0_7] : memref<64x32xf32, #tpu.memory_space<vmem>>, vector<64x32xf32>
    %cst_8 = arith.constant dense<0.000000e+00> : vector<8x32xf32>
    %13 = tpu.matmul %11, %12, %cst_8 {dimension_numbers = #tpu.dot_dimension_numbers<[1], [0], [0], [1], [0, 0, 1, 1], [], []>} : vector<8x64xf32>, vector<64x32xf32>, vector<8x32xf32> -> vector<8x32xf32>
    %c0_9 = arith.constant 0 : index
    %c0_10 = arith.constant 0 : index
    %14 = vector.load %arg5[%c0_9, %c0_10] : memref<1x32xf32, #tpu.memory_space<vmem>>, vector<1x32xf32>
    %15 = vector.broadcast %14 : vector<1x32xf32> to vector<8x32xf32>
    %16 = arith.addf %13, %15 : vector<8x32xf32>
    %c0_11 = arith.constant 0 : index
    %c0_12 = arith.constant 0 : index
    %c0_13 = arith.constant 0 : index
    %17 = vector.load %arg6[%c0_11, %c0_12, %c0_13] : memref<2x8x32xf32, #tpu.memory_space<vmem>>, vector<2x8x32xf32>
    %18 = vector.shape_cast %16 : vector<8x32xf32> to vector<1x8x32xf32>
    %19 = vector.broadcast %18 : vector<1x8x32xf32> to vector<2x8x32xf32>
    %20 = arith.addf %17, %19 : vector<2x8x32xf32>
    %c0_14 = arith.constant 0 : index
    %c0_15 = arith.constant 0 : index
    %c0_16 = arith.constant 0 : index
    %21 = vector.load %arg7[%c0_14, %c0_15, %c0_16] : memref<2x8x32xf32, #tpu.memory_space<vmem>>, vector<2x8x32xf32>
    tpu.vector_store %arg7[%c0_14, %c0_15, %c0_16], %20 {strides = array<i32>} : memref<2x8x32xf32, #tpu.memory_space<vmem>>, vector<2x8x32xf32>,
    return
  }
  func.func @transform_0(%arg0: i32) -> (i32, i32) {
    %c0_i32 = arith.constant 0 : i32
    %c0_i32_0 = arith.constant 0 : i32
    %c0_i32_1 = arith.constant 0 : i32
    return %c0_i32, %c0_i32_0 : i32, i32
  }
  func.func @transform_1(%arg0: i32) -> (i32, i32) {
    %c0_i32 = arith.constant 0 : i32
    %c0_i32_0 = arith.constant 0 : i32
    %c0_i32_1 = arith.constant 0 : i32
    return %c0_i32, %c0_i32_0 : i32, i32
  }
  func.func @transform_2(%arg0: i32) -> (i32, i32) {
    %c0_i32 = arith.constant 0 : i32
    %c0_i32_0 = arith.constant 0 : i32
    %c0_i32_1 = arith.constant 0 : i32
    return %c0_i32, %c0_i32_0 : i32, i32
  }
  func.func @transform_3(%arg0: i32) -> (i32, i32) {
    %c0_i32 = arith.constant 0 : i32
    %c0_i32_0 = arith.constant 0 : i32
    %c0_i32_1 = arith.constant 0 : i32
    return %c0_i32, %c0_i32_0 : i32, i32
  }
  func.func @transform_4(%arg0: i32) -> (i32, i32) {
    %c0_i32 = arith.constant 0 : i32
    %c0_i32_0 = arith.constant 0 : i32
    %c0_i32_1 = arith.constant 0 : i32
    return %c0_i32, %c0_i32_0 : i32, i32
  }
  func.func @transform_5(%arg0: i32) -> (i32, i32, i32) {
    %c0_i32 = arith.constant 0 : i32
    %c0_i32_0 = arith.constant 0 : i32
    %c0_i32_1 = arith.constant 0 : i32
    %c0_i32_2 = arith.constant 0 : i32
    return %c0_i32, %c0_i32_0, %c0_i32_1 : i32, i32, i32
  }
  func.func @transform_6(%arg0: i32) -> (i32, i32, i32) {
    %c0_i32 = arith.constant 0 : i32
    %c0_i32_0 = arith.constant 0 : i32
    %c0_i32_1 = arith.constant 0 : i32
    %c0_i32_2 = arith.constant 0 : i32
    return %c0_i32, %c0_i32_0, %c0_i32_1 : i32, i32, i32
  }
}

</mosaic_0001>

<llo_original>
// kernel: tpu_custom_call.1
$region0: #{tpu_custom_call.1}
  #allocation0 [shape = 'u32[]', space=smem, size = 0x4, offset = 0x4, fixed_abs, tag = 'smem constant byte address 0x4 - core index']
  #allocation1 [shape = 'u32[144,128]{1,0:T(1,128)}', space=vmem, size = 0x12000, scoped, tag = 'internal scratch']
  %s0 = inlined_call_operand.vmem [shape: f32[8,32], index: 0, kind: input, shape index: {}]
  %s1 = inlined_call_operand.vmem [shape: f32[32,64], index: 1, kind: input, shape index: {}]
  %s2 = inlined_call_operand.vmem [shape: f32[1,64], index: 2, kind: input, shape index: {}]
  %s3 = inlined_call_operand.vmem [shape: f32[64,32], index: 3, kind: input, shape index: {}]
  %s4 = inlined_call_operand.vmem [shape: f32[1,32], index: 4, kind: input, shape index: {}]
  %s5 = inlined_call_operand.vmem [shape: f32[2,8,32], index: 5, kind: input, shape index: {}]
  %s6 = inlined_call_operand.hbm [shape: f32[2,8,32], index: 6, kind: output, shape index: {}]
  %s7 = sld [smem:[#allocation0]]
  $region34: #{tpu_custom_call.1} parent=0
    _
  %s9 = ssub.s32 1, %s7
  %s10 = scalar_select 0, %s9, %s7
  $region1: #{tpu_custom_call.1} parent=0
    #allocation2 [shape = 'u8[8192]{0}', space=vmem, size = 0x2000, scoped, tag = 'output window, operand 0, single buffered']
    #allocation3 [shape = 's32[1]{0}', space=sflag, size = 0x4, scoped, tag = 'scoped memory for tpu_custom_call.1']
    %11 = vsyncpa [#allocation3], 0
    // Predicated region
    $region2: #{tpu_custom_call.1} parent=1 // pred_check
      _
    $region3: #{tpu_custom_call.1} parent=1 // pred_check_branch
      %13 = sbr.rel (0) target = $region5
    $region4: #{tpu_custom_call.1} parent=1 // pred_region
      _
    $region5: #{tpu_custom_call.1} parent=1 // pred_fallthru
      _
    // Predicated region
    $region6: #{tpu_custom_call.1} parent=1 // pred_check
      _
    $region7: #{tpu_custom_call.1} parent=1 // pred_check_branch
      %15 = sbr.rel (0) target = $region9
    $region8: #{tpu_custom_call.1} parent=1 // pred_region
      _
    $region9: #{tpu_custom_call.1} parent=1 // pred_fallthru
      _
    // Predicated region
    $region10: #{tpu_custom_call.1} parent=1 // pred_check
      _
    $region11: #{tpu_custom_call.1} parent=1 // pred_check_branch
      %17 = sbr.rel (0) target = $region13
    $region12: #{tpu_custom_call.1} parent=1 // pred_region
      _
    $region13: #{tpu_custom_call.1} parent=1 // pred_fallthru
      _
    // Predicated region
    $region14: #{tpu_custom_call.1} parent=1 // pred_check
      _
    $region15: #{tpu_custom_call.1} parent=1 // pred_check_branch
      %19 = sbr.rel (0) target = $region17
    $region16: #{tpu_custom_call.1} parent=1 // pred_region
      _
    $region17: #{tpu_custom_call.1} parent=1 // pred_fallthru
      _
    // Predicated region
    $region18: #{tpu_custom_call.1} parent=1 // pred_check
      _
    $region19: #{tpu_custom_call.1} parent=1 // pred_check_branch
      %21 = sbr.rel (0) target = $region21
    $region20: #{tpu_custom_call.1} parent=1 // pred_region
      _
    $region21: #{tpu_custom_call.1} parent=1 // pred_fallthru
      _
    // Predicated region
    $region22: #{tpu_custom_call.1} parent=1 // pred_check
      _
    $region23: #{tpu_custom_call.1} parent=1 // pred_check_branch
      %23 = sbr.rel (0) target = $region25
    $region24: #{tpu_custom_call.1} parent=1 // pred_region
      _
    $region25: #{tpu_custom_call.1} parent=1 // pred_fallthru
      _
    %v24 = vld [vmem:[%s0] sm:$0xff]
    %v25 = vld [vmem:[%s1] sm:$0xff]
    %v26 = vld [vmem:[%s1 + $0x8] sm:$0xff]
    %v27 = vld [vmem:[%s1 + $0x10] sm:$0xff]
    %v28 = vld [vmem:[%s1 + $0x18] sm:$0xff]
    %v29 = vld [vmem:[%s2] sm:$0x1]
    %v31 = vlaneseq
    %v32 = vshrl.u32 %v31, 7
    %v33 = vsub.s32 0, %v32
    %v34 = vrot.slane %v29, %v33
    %vm36 = vcmask 261120
    %v38 = vsel %vm36, %v24, 0
    %40 = vmatprep.subr.mxu0 0.0
    %41 = vmatpush1.msra.mxu0 0.0
    %42 = vmatprep.subr.mxu0 0.0
    %43 = vmatpush1.msra.mxu0 0.0
    %44 = vmatprep.subr.mxu0 0.0
    %45 = vmatpush1.msra.mxu0 0.0
    %46 = vmatprep.subr.mxu0 0.0
    %47 = vmatpush1.msra.mxu0 0.0
    %48 = vmatprep.subr.mxu0 0.0
    %49 = vmatpush1.msra.mxu0 0.0
    %50 = vmatprep.subr.mxu0 0.0
    %51 = vmatpush1.msra.mxu0 0.0
    %52 = vmatprep.subr.mxu0 0.0
    %53 = vmatpush1.msra.mxu0 0.0
    %54 = vmatprep.subr.mxu0 0.0
    %55 = vmatpush1.msra.mxu0 0.0
    %56 = vmatprep.subr.mxu0 0.0
    %57 = vmatpush1.msra.mxu0 0.0
    %58 = vmatprep.subr.mxu0 0.0
    %59 = vmatpush1.msra.mxu0 0.0
    %60 = vmatprep.subr.mxu0 0.0
    %61 = vmatpush1.msra.mxu0 0.0
    %62 = vmatprep.subr.mxu0 0.0
    %63 = vmatpush1.msra.mxu0 0.0
    %64 = vmatprep.subr.mxu0 0.0
    %65 = vmatpush1.msra.mxu0 %v28
    %66 = vmatprep.subr.mxu0 0.0
    %67 = vmatpush1.msra.mxu0 %v27
    %68 = vmatprep.subr.mxu0 0.0
    %69 = vmatpush1.msra.mxu0 %v26
    %70 = vmatprep.subr.mxu0 0.0
    %71 = vmatpush1.msra.mxu0 %v25
    %72 = vmatprep.subr.mxu0 0.0
    %73 = vmatpush2.msra.mxu0 0.0
    %74 = vmatprep.subr.mxu0 0.0
    %75 = vmatpush2.msra.mxu0 0.0
    %76 = vmatprep.subr.mxu0 0.0
    %77 = vmatpush2.msra.mxu0 0.0
    %78 = vmatprep.subr.mxu0 0.0
    %79 = vmatpush2.msra.mxu0 0.0
    %80 = vmatprep.subr.mxu0 0.0
    %81 = vmatpush2.msra.mxu0 0.0
    %82 = vmatprep.subr.mxu0 0.0
    %83 = vmatpush2.msra.mxu0 0.0
    %84 = vmatprep.subr.mxu0 0.0
    %85 = vmatpush2.msra.mxu0 0.0
    %86 = vmatprep.subr.mxu0 0.0
    %87 = vmatpush2.msra.mxu0 0.0
    %88 = vmatprep.subr.mxu0 0.0
    %89 = vmatpush2.msra.mxu0 0.0
    %90 = vmatprep.subr.mxu0 0.0
    %91 = vmatpush2.msra.mxu0 0.0
    %92 = vmatprep.subr.mxu0 0.0
    %93 = vmatpush2.msra.mxu0 0.0
    %94 = vmatprep.subr.mxu0 0.0
    %95 = vmatpush2.msra.mxu0 0.0
    %96 = vmatprep.subr.mxu0 0.0
    %97 = vmatpush2.msra.mxu0 0.0
    %98 = vmatprep.subr.mxu0 0.0
    %99 = vmatpush2.msra.mxu0 0.0
    %100 = vmatprep.subr.mxu0 0.0
    %101 = vmatpush2.msra.mxu0 0.0
    %102 = vmatprep.subr.mxu0 0.0
    %103 = vmatpush2.msra.mxu0 0.0
    %104 = vmatprep.mubr.f32.mxu0 0.0
    %105 = vmatmul.mubr.f32.gmra.mxu0 %v38
    %v106 = vpop.f32.mrf.mxu0
    %v107 = vadd.f32 %v34, %v106
    %v108 = vpop.f32.mrf.mxu0
    %109 = vdwg.mxu0
    %v110 = vxor.u32 %v107, 2147483648
    %v111 = vmul.f32 %v110, 1.442695
    %v112 = vpow.pop %v111
    %v113 = vadd.f32 %v112, 1.0
    %v114 = vrcp.pop %v113
    %v115 = vmul.f32 1.0, %v114
    %v116 = vmul.f32 %v107, %v115
    %v117 = vld [vmem:[%s3] sm:$0xff]
    %v118 = vld [vmem:[%s3 + $0x8] sm:$0xff]
    %v119 = vld [vmem:[%s3 + $0x10] sm:$0xff]
    %v120 = vld [vmem:[%s3 + $0x18] sm:$0xff]
    %v121 = vld [vmem:[%s3 + $0x20] sm:$0xff]
    %v122 = vld [vmem:[%s3 + $0x28] sm:$0xff]
    %v123 = vld [vmem:[%s3 + $0x30] sm:$0xff]
    %v124 = vld [vmem:[%s3 + $0x38] sm:$0xff]
    %v125 = vld [vmem:[%s4] sm:$0x1]
    %v127 = vlaneseq
    %v128 = vshrl.u32 %v127, 7
    %v129 = vsub.s32 0, %v128
    %v130 = vrot.slane %v125, %v129
    %vm132 = vcmask 523264
    %v134 = vsel %vm132, %v116, 0
    %136 = vmatprep.subr.mxu0 0.0
    %137 = vmatpush1.msra.mxu0 0.0
    %138 = vmatprep.subr.mxu0 0.0
    %139 = vmatpush1.msra.mxu0 0.0
    %140 = vmatprep.subr.mxu0 0.0
    %141 = vmatpush1.msra.mxu0 0.0
    %142 = vmatprep.subr.mxu0 0.0
    %143 = vmatpush1.msra.mxu0 0.0
    %144 = vmatprep.subr.mxu0 0.0
    %145 = vmatpush1.msra.mxu0 0.0
    %146 = vmatprep.subr.mxu0 0.0
    %147 = vmatpush1.msra.mxu0 0.0
    %148 = vmatprep.subr.mxu0 0.0
    %149 = vmatpush1.msra.mxu0 0.0
    %150 = vmatprep.subr.mxu0 0.0
    %151 = vmatpush1.msra.mxu0 0.0
    %152 = vmatprep.subr.mxu0 0.0
    %153 = vmatpush1.msra.mxu0 %v124
    %154 = vmatprep.subr.mxu0 0.0
    %155 = vmatpush1.msra.mxu0 %v123
    %156 = vmatprep.subr.mxu0 0.0
    %157 = vmatpush1.msra.mxu0 %v122
    %158 = vmatprep.subr.mxu0 0.0
    %159 = vmatpush1.msra.mxu0 %v121
    %160 = vmatprep.subr.mxu0 0.0
    %161 = vmatpush1.msra.mxu0 %v120
    %162 = vmatprep.subr.mxu0 0.0
    %163 = vmatpush1.msra.mxu0 %v119
    %164 = vmatprep.subr.mxu0 0.0
    %165 = vmatpush1.msra.mxu0 %v118
    %166 = vmatprep.subr.mxu0 0.0
    %167 = vmatpush1.msra.mxu0 %v117
    %168 = vmatprep.subr.mxu0 0.0
    %169 = vmatpush2.msra.mxu0 0.0
    %170 = vmatprep.subr.mxu0 0.0
    %171 = vmatpush2.msra.mxu0 0.0
    %172 = vmatprep.subr.mxu0 0.0
    %173 = vmatpush2.msra.mxu0 0.0
    %174 = vmatprep.subr.mxu0 0.0
    %175 = vmatpush2.msra.mxu0 0.0
    %176 = vmatprep.subr.mxu0 0.0
    %177 = vmatpush2.msra.mxu0 0.0
    %178 = vmatprep.subr.mxu0 0.0
    %179 = vmatpush2.msra.mxu0 0.0
    %180 = vmatprep.subr.mxu0 0.0
    %181 = vmatpush2.msra.mxu0 0.0
    %182 = vmatprep.subr.mxu0 0.0
    %183 = vmatpush2.msra.mxu0 0.0
    %184 = vmatprep.subr.mxu0 0.0
    %185 = vmatpush2.msra.mxu0 0.0
    %186 = vmatprep.subr.mxu0 0.0
    %187 = vmatpush2.msra.mxu0 0.0
    %188 = vmatprep.subr.mxu0 0.0
    %189 = vmatpush2.msra.mxu0 0.0
    %190 = vmatprep.subr.mxu0 0.0
    %191 = vmatpush2.msra.mxu0 0.0
    %192 = vmatprep.subr.mxu0 0.0
    %193 = vmatpush2.msra.mxu0 0.0
    %194 = vmatprep.subr.mxu0 0.0
    %195 = vmatpush2.msra.mxu0 0.0
    %196 = vmatprep.subr.mxu0 0.0
    %197 = vmatpush2.msra.mxu0 0.0
    %198 = vmatprep.subr.mxu0 0.0
    %199 = vmatpush2.msra.mxu0 0.0
    %200 = vmatprep.mubr.f32.mxu0 0.0
    %201 = vmatmul.mubr.f32.gmra.mxu0 %v134
    %v202 = vpop.f32.mrf.mxu0
    %v203 = vadd.f32 %v130, %v202
    %v204 = vpop.f32.mrf.mxu0
    %205 = vdwg.mxu0
    %v206 = vld [vmem:[%s5] sm:$0xff]
    %v207 = vld [vmem:[%s5 + $0x8] sm:$0xff]
    %v208 = vadd.f32 %v206, %v203
    %v209 = vadd.f32 %v207, %v203
    %210 = vst.msk [vmem:[#allocation2] sm:$0xff] %vm36, %v208
    %211 = vst.msk [vmem:[#allocation2 + $0x8] sm:$0xff] %vm36, %v209
    // Predicated region
    $region26: #{tpu_custom_call.1} parent=1 // pred_check
      _
    $region27: #{tpu_custom_call.1} parent=1 // pred_check_branch
      %213 = sbr.rel (0) target = $region29
    $region28: #{tpu_custom_call.1} parent=1 // pred_region
      %s215 = ssub.s32 256, 256
      %216 = vsyncadd [#allocation3], %s215
      %s217 = sshll.u32 [#allocation2], 4
      %s218 = int_to_ptr.vmem [resolvable:$true] %s217
      %223 = dma.vmem_to_hbm [thread:$0]  %s218, 256, %s6, [#allocation3], 128, 128, 8
    $region29: #{tpu_custom_call.1} parent=1 // pred_fallthru
      _
    // Predicated region
    $region30: #{tpu_custom_call.1} parent=1 // pred_check
      _
    $region31: #{tpu_custom_call.1} parent=1 // pred_check_branch
      %225 = sbr.rel (0) target = $region33
    $region32: #{tpu_custom_call.1} parent=1 // pred_region
      %226 = dma.done [#allocation3], 256
    $region33: #{tpu_custom_call.1} parent=1 // pred_fallthru
      _
    %227 = vsyncpa [#allocation3], 1

</llo_original>
